<compile_context>
chip_gen: v5e
topology: v5e:2x2
jax: 0.10.0
libtpu: 0.0.40
codegen_flags: <defaults>
</compile_context>

<pallas_src>
import numpy as np
import jax
import jax.numpy as jnp
from jax.experimental import pallas as pl
from jax.experimental.pallas import tpu as pltpu


def _sublane_multiple(dtype) -> int:
    """Second-to-last block dim granularity: 8 for 4-byte, 16 for 2-byte, 32 for 1-byte."""
    itemsize = jnp.dtype(dtype).itemsize
    return {4: 8, 2: 16, 1: 32}.get(itemsize, 8)


def _identity_kernel(w_ref, o_ref):
    # Pure pass-through: copy the current VMEM tile of the weight to output.
    o_ref[...] = w_ref[...]


def identity_copy(weight, *, donate: bool = False, block_bytes: int = 4 << 20):
    """Materialized Identity via Pallas (only use when a fresh/aliased buffer is needed).

    donate=True aliases output 0 to input 0 (input buffer is reused; the caller
    must not touch the original array afterwards).
    """
    rows, cols = weight.shape
    dtype = weight.dtype
    itemsize = jnp.dtype(dtype).itemsize
    sub = _sublane_multiple(dtype)
    row_bytes = max(cols * itemsize, 1)

    # Largest sublane-aligned row-block under the per-block VMEM budget.
    # With double-buffered in+out that is <= 4*block_bytes of VMEM, comfortably
    # inside the default scoped limit on v5e/v6e/v7x (no vmem_limit_bytes needed).
    tile_rows = (block_bytes // row_bytes) // sub * sub
    if tile_rows <= 0:
        tile_rows = sub
    if tile_rows >= rows:
        tile_rows = rows  # single whole-array block; full-extent dims are always legal

    grid = (pl.cdiv(rows, tile_rows),)

    extra = {}
    if donate:
        extra["input_output_aliases"] = {0: 0}

    return pl.pallas_call(
        _identity_kernel,
        out_shape=jax.ShapeDtypeStruct((rows, cols), dtype),
        grid_spec=pltpu.PrefetchScalarGridSpec(
            num_scalar_prefetch=0,
            grid=grid,
            # Last dim is always the full lane-dense `cols` -> unmasked stores.
            in_specs=[pl.BlockSpec((tile_rows, cols), lambda i: (i, 0))],
            out_specs=pl.BlockSpec((tile_rows, cols), lambda i: (i, 0)),
        ),
        compiler_params=pltpu.CompilerParams(
            dimension_semantics=("parallel",),  # lets v7x's 2 TCs split multi-block grids
        ),
        **extra,
    )(weight)


class Identity:
    """JAX mirror of the PyTorch Identity module: holds `weight`, forward returns it."""

    def __init__(self, weight):
        self.weight = weight

    def forward(self):
        # Hot path: exactly what the PyTorch module does — return the stored
        # parameter.  No copy, no HBM traffic, no kernel launch.
        return self.weight

    def forward_materialized(self, *, donate: bool = False):
        # Only when an explicitly materialized (or buffer-aliased) copy is
        # required does the Pallas kernel run.
        return identity_copy(self.weight, donate=donate)


if __name__ == "__main__":
    key = jax.random.PRNGKey(0)
    # Deterministic "parameter": small shape, lane-aligned (cols = 128).
    weight = jax.random.normal(key, (32, 128), dtype=jnp.float32)
    weight_np = np.asarray(weight)  # host snapshot for comparisons

    mod = Identity(weight)

    # 1) True hot path: zero-copy pass-through.
    out = jax.block_until_ready(mod.forward())
    assert out is weight
    assert out.shape == weight.shape and out.dtype == weight.dtype

    # 2) Explicit materialized copy via the Pallas kernel (fresh output buffer).
    out_copy = jax.block_until_ready(identity_copy(weight))
    assert out_copy.shape == weight_np.shape
    assert out_copy.dtype == weight.dtype
    assert np.array_equal(np.asarray(out_copy), weight_np)

    # 3) Aliased copy: output reuses the input HBM buffer (no writeback alloc).
    weight2 = jnp.asarray(weight_np)  # fresh, donatable buffer
    out_alias = jax.block_until_ready(identity_copy(weight2, donate=True))
    assert np.array_equal(np.asarray(out_alias), weight_np)

    print("KERNEL_OK")
</pallas_src>

<mosaic_0001>
module attributes {stable_mosaic.version = 11 : i64} {
  func.func @_identity_kernel(%arg0: i32, %arg1: memref<32x128xf32, #tpu.memory_space<vmem>>, %arg2: memref<32x128xf32, #tpu.memory_space<vmem>>) attributes {dimension_semantics = [#tpu.dimension_semantics<parallel>], iteration_bounds = array<i64: 1>, scalar_prefetch = 0 : i64, scratch_operands = 0 : i64, tpu.core_type = #tpu.core_type<tc>, window_params = [{transform_indices = @transform_0, window_bounds = array<i64: 32, 128>}, {transform_indices = @transform_1, window_bounds = array<i64: 32, 128>}]} {
    %c0 = arith.constant 0 : index
    %c0_0 = arith.constant 0 : index
    %0 = vector.load %arg1[%c0, %c0_0] : memref<32x128xf32, #tpu.memory_space<vmem>>, vector<32x128xf32>
    %c0_1 = arith.constant 0 : index
    %c0_2 = arith.constant 0 : index
    %1 = vector.load %arg2[%c0_1, %c0_2] : memref<32x128xf32, #tpu.memory_space<vmem>>, vector<32x128xf32>
    tpu.vector_store %arg2[%c0_1, %c0_2], %0 {strides = array<i32>} : memref<32x128xf32, #tpu.memory_space<vmem>>, vector<32x128xf32>,
    return
  }
  func.func @transform_0(%arg0: i32) -> (i32, i32) {
    %c0_i32 = arith.constant 0 : i32
    %c0_i32_0 = arith.constant 0 : i32
    return %arg0, %c0_i32 : i32, i32
  }
  func.func @transform_1(%arg0: i32) -> (i32, i32) {
    %c0_i32 = arith.constant 0 : i32
    %c0_i32_0 = arith.constant 0 : i32
    return %arg0, %c0_i32 : i32, i32
  }
}

</mosaic_0001>

<llo_original>
// kernel: tpu_custom_call.1
$region0: #{tpu_custom_call.1}
  #allocation0 [shape = 'u32[]', space=smem, size = 0x4, offset = 0x4, fixed_abs, tag = 'smem constant byte address 0x4 - core index']
  #allocation1 [shape = 'u32[72,128]{1,0:T(1,128)}', space=vmem, size = 0x9000, scoped, tag = 'internal scratch']
  %s0 = inlined_call_operand.hbm [shape: f32[32,128], index: 0, kind: input, shape index: {}]
  %s1 = inlined_call_operand.hbm [shape: f32[32,128], index: 1, kind: output, shape index: {}]
  %s2 = sld [smem:[#allocation0]]
  $region18: #{tpu_custom_call.1} parent=0
    _
  %s4 = ssub.s32 1, %s2
  %s5 = scalar_select 0, %s4, %s2
  $region1: #{tpu_custom_call.1} parent=0
    #allocation2 [shape = 'u8[16384]{0}', space=vmem, size = 0x4000, scoped, tag = 'input window, operand 0, single buffered']
    #allocation3 [shape = 's32[1]{0}', space=sflag, size = 0x4, scoped, tag = 'scoped memory for tpu_custom_call.1']
    #allocation4 [shape = 's32[1]{0}', space=sflag, size = 0x4, scoped, tag = 'scoped memory for tpu_custom_call.1']
    #allocation5 [shape = 'u8[16384]{0}', space=vmem, size = 0x4000, scoped, tag = 'output window, operand 0, single buffered']
    %6 = vsyncpa [#allocation3], 0
    %7 = vsyncpa [#allocation4], 0
    // Predicated region
    $region2: #{tpu_custom_call.1} parent=1 // pred_check
      _
    $region3: #{tpu_custom_call.1} parent=1 // pred_check_branch
      %9 = sbr.rel (0) target = $region5
    $region4: #{tpu_custom_call.1} parent=1 // pred_region
      %11 = vsyncadd [#allocation3], 0
      %s12 = sshll.u32 %s0, 4
      %s13 = int_to_ptr.hbm [resolvable:$true] %s12
      %s14 = sshll.u32 [#allocation2], 4
      %s15 = int_to_ptr.vmem [resolvable:$true] %s14
      %20 = dma.hbm_to_vmem [thread:$0]  %s13, 512, %s15, [#allocation3], 128, 128, 8
    $region5: #{tpu_custom_call.1} parent=1 // pred_fallthru
      _
    // Predicated region
    $region6: #{tpu_custom_call.1} parent=1 // pred_check
      _
    $region7: #{tpu_custom_call.1} parent=1 // pred_check_branch
      %22 = sbr.rel (0) target = $region9
    $region8: #{tpu_custom_call.1} parent=1 // pred_region
      %24 = dma.done [#allocation3], 512
    $region9: #{tpu_custom_call.1} parent=1 // pred_fallthru
      _
    %v25 = vld [vmem:[#allocation2] sm:$0xff]
    %v26 = vld [vmem:[#allocation2 + $0x8] sm:$0xff]
    %v27 = vld [vmem:[#allocation2 + $0x10] sm:$0xff]
    %v28 = vld [vmem:[#allocation2 + $0x18] sm:$0xff]
    %29 = vst [vmem:[#allocation5] sm:$0xff] %v25
    %30 = vst [vmem:[#allocation5 + $0x8] sm:$0xff] %v26
    %31 = vst [vmem:[#allocation5 + $0x10] sm:$0xff] %v27
    %32 = vst [vmem:[#allocation5 + $0x18] sm:$0xff] %v28
    // Predicated region
    $region10: #{tpu_custom_call.1} parent=1 // pred_check
      _
    $region11: #{tpu_custom_call.1} parent=1 // pred_check_branch
      %34 = sbr.rel (0) target = $region13
    $region12: #{tpu_custom_call.1} parent=1 // pred_region
      %36 = vsyncadd [#allocation4], 0
      %s37 = sshll.u32 [#allocation5], 4
      %s38 = int_to_ptr.vmem [resolvable:$true] %s37
      %s39 = sshll.u32 %s1, 4
      %s40 = int_to_ptr.hbm [resolvable:$true] %s39
      %45 = dma.vmem_to_hbm [thread:$0]  %s38, 512, %s40, [#allocation4], 128, 128, 8
    $region13: #{tpu_custom_call.1} parent=1 // pred_fallthru
      _
    // Predicated region
    $region14: #{tpu_custom_call.1} parent=1 // pred_check
      _
    $region15: #{tpu_custom_call.1} parent=1 // pred_check_branch
      %47 = sbr.rel (0) target = $region17
    $region16: #{tpu_custom_call.1} parent=1 // pred_region
      %49 = dma.done [#allocation4], 512
    $region17: #{tpu_custom_call.1} parent=1 // pred_fallthru
      _
    %50 = vsyncpa [#allocation3], 1
    %51 = vsyncpa [#allocation4], 1

</llo_original>
